<compile_context>
chip_gen: v5e
topology: v5e:2x2
jax: 0.10.0
libtpu: 0.0.40
codegen_flags: <defaults>
</compile_context>

<pallas_src>
import math

import jax
import jax.numpy as jnp
import numpy as np
from jax import lax
from jax.experimental import pallas as pl
from jax.experimental.pallas import tpu as pltpu

ALPHA = 4.0                            # Triplet(alpha=4) module default
MARGIN = 0.7
KEEP_THRESH = math.exp(MARGIN) - 1.0   # prod > exp(0.7)-1  <=>  log(prod + 1) > 0.7
EPS = 1e-12
_OUT_LANES = 128                       # lane-dense packed per-anchor output width


def _triplet_kernel(flags_ref,                      # (A, P) int32 (SMEM, scalar prefetch)
                    x_ref,                          # (N, D)  f32, resident full block
                    xt_ref,                         # (1, TP, D) f32, positive-column rows
                    sqa_ref,                        # (TA, 1) f32, anchor squared norms
                    sqr_ref,                        # (1, N)  f32, all squared norms
                    sqt_ref,                        # (1, 1, TP) f32, tile squared norms
                    ta_ref,                         # (TA, 1) int32, anchor targets
                    tr_ref,                         # (1, N)  int32, all targets
                    tt_ref,                         # (1, 1, TP) int32, tile targets
                    out_ref,                        # (TA, 128) f32, packed per-anchor stats
                    eneg_s,                         # (TA, N) f32: masked exp(m - dist)
                    m_s,                            # (TA, 1) f32: per-anchor positive max
                    accl_s,                         # (TA, N) f32: kept log-sum accumulator
                    accc_s,                         # (TA, N) f32: kept count accumulator
                    pos_s, neg_s):                  # (TA, 1) f32: pos / neg distance sums
    i = pl.program_id(0)
    p = pl.program_id(1)
    n_ptiles = pl.num_programs(1)

    blk = out_ref.shape[0]             # anchor tile TA
    n = x_ref.shape[0]                 # batch size N
    tp = xt_ref.shape[1]               # positive-column tile TP

    # Anchor rows sliced from the resident full block (no duplicate DMA stream).
    row0 = pl.multiple_of(i * blk, blk)
    xa = x_ref[pl.ds(row0, blk), :]                                     # (TA, D)
    sqa = sqa_ref[...]                                                  # (TA, 1)
    tgt_a = ta_ref[...]                                                 # (TA, 1) int32

    # ---- once per anchor tile: full-row distances, masks, e_neg, pos/neg sums ----
    @pl.when(p == 0)
    def _init():
        gram = lax.dot_general(xa, x_ref[...], (((1,), (1,)), ((), ())),
                               preferred_element_type=jnp.float32)      # (TA, N)
        dist = ALPHA * jnp.sqrt(jnp.maximum(sqa + sqr_ref[...] - 2.0 * gram, EPS))
        same = tgt_a == tr_ref[...]                                     # (TA, N)
        rid = row0 + lax.broadcasted_iota(jnp.int32, (blk, n), 0)
        cid = lax.broadcasted_iota(jnp.int32, (blk, n), 1)
        pos_m = jnp.logical_and(same, rid != cid)
        neg_m = jnp.logical_not(same)
        # Center with the max over POSITIVE distances (dist > 0, so a 0 fill is a safe
        # identity): exactly the literal exp(d_pos - d_neg) overflow envelope, no 0*inf NaNs.
        m = jnp.max(jnp.where(pos_m, dist, 0.0), axis=1, keepdims=True)
        m_s[...] = m
        eneg_s[...] = jnp.where(neg_m, jnp.exp(m - dist), 0.0)
        pos_s[...] = jnp.sum(jnp.where(pos_m, dist, 0.0), axis=1, keepdims=True)
        neg_s[...] = jnp.sum(jnp.where(neg_m, dist, 0.0), axis=1, keepdims=True)
        accl_s[...] = jnp.zeros_like(accl_s)
        accc_s[...] = jnp.zeros_like(accc_s)

    # ---- per positive-column tile: skipped entirely when it holds no positive pair ----
    @pl.when(flags_ref[i, p] != 0)
    def _work():
        xp = xt_ref[0]                                                  # (TP, D)
        gram_p = lax.dot_general(xa, xp, (((1,), (1,)), ((), ())),
                                 preferred_element_type=jnp.float32)    # (TA, TP)
        dist_p = ALPHA * jnp.sqrt(jnp.maximum(sqa + sqt_ref[0] - 2.0 * gram_p, EPS))
        same_p = tgt_a == tt_ref[0]                                     # (TA, TP)
        rid_p = row0 + lax.broadcasted_iota(jnp.int32, (blk, tp), 0)
        cid_p = p * tp + lax.broadcasted_iota(jnp.int32, (blk, tp), 1)
        pos_p = jnp.logical_and(same_p, rid_p != cid_p)
        e_pos = jnp.where(pos_p, jnp.exp(dist_p - m_s[...]), 0.0)       # (TA, TP), <= 1

        e_neg = eneg_s[...]                                             # (TA, N)
        l_acc = jnp.zeros((blk, n), jnp.float32)
        c_acc = jnp.zeros((blk, n), jnp.float32)
        for c in range(tp):        # unrolled: TP independent EUP/VALU chains, no 3-D slab
            prod = e_pos[:, c:c + 1] * e_neg                            # (TA, N)
            keep = prod > KEEP_THRESH        # count stays off the EUP log chain
            l_acc = l_acc + jnp.where(keep, jnp.log(prod + 1.0), 0.0)
            c_acc = c_acc + jnp.where(keep, 1.0, 0.0)
        accl_s[...] += l_acc
        accc_s[...] += c_acc

    # ---- once per anchor tile: single lane reduce + lane-dense packed output ----
    @pl.when(p == n_ptiles - 1)
    def _fin():
        losssum = jnp.sum(accl_s[...], axis=1, keepdims=True)           # (TA, 1)
        count = jnp.sum(accc_s[...], axis=1, keepdims=True)             # (TA, 1)
        lane = lax.broadcasted_iota(jnp.int32, (blk, _OUT_LANES), 1)
        out_ref[...] = (jnp.where(lane == 0, losssum, 0.0) +
                        jnp.where(lane == 1, count, 0.0) +
                        jnp.where(lane == 2, pos_s[...], 0.0) +
                        jnp.where(lane == 3, neg_s[...], 0.0))


def _pick_tiles(n):
    """(anchor tile TA, positive-column tile TP); both divide N, TA a multiple of 8."""
    if n % 8 != 0 or n <= 8:
        # TODO(synk): pad odd / tiny batches instead of falling back to a single unrolled tile.
        return n, n
    tp = 8
    ta = 8
    for cand in (128, 64, 32, 16, 8):
        # Must divide N, keep >= 2 anchor tiles (both v7x TensorCores busy), and bound the
        # (TA, N) f32 scratches (~3 of them) well inside the 48 MiB VMEM limit.
        if n % cand == 0 and cand <= n // 2 and cand * n * 4 <= 4 * 1024 * 1024:
            ta = cand
            break
    return ta, tp


def triplet_forward(inputs, targets):
    """Returns (loss, accuracy, pos_d, neg_d) matching Triplet(alpha=4).forward."""
    x = inputs.astype(jnp.float32)
    t = targets.astype(jnp.int32)
    n, d = x.shape
    ta, tp = _pick_tiles(n)
    a_tiles, p_tiles = n // ta, n // tp

    sq = jnp.sum(x * x, axis=1)                                        # (N,) squared norms
    same = t[:, None] == t[None, :]
    pos_full = jnp.logical_and(same, jnp.logical_not(jnp.eye(n, dtype=bool)))
    # (A, P): does this (anchor tile, positive-column tile) contain any positive pair?
    flags = pos_full.reshape(a_tiles, ta, p_tiles, tp).any(axis=(1, 3)).astype(jnp.int32)

    grid_spec = pltpu.PrefetchScalarGridSpec(
        num_scalar_prefetch=1,
        grid=(a_tiles, p_tiles),
        in_specs=[
            pl.BlockSpec((n, d), lambda i, p, f: (0, 0)),              # x, resident full
            pl.BlockSpec((1, tp, d), lambda i, p, f: (p, 0, 0)),       # positive-column rows
            pl.BlockSpec((ta, 1), lambda i, p, f: (i, 0)),             # anchor ||x||^2
            pl.BlockSpec((1, n), lambda i, p, f: (0, 0)),              # all ||x||^2
            pl.BlockSpec((1, 1, tp), lambda i, p, f: (p, 0, 0)),       # tile ||x||^2
            pl.BlockSpec((ta, 1), lambda i, p, f: (i, 0)),             # anchor targets
            pl.BlockSpec((1, n), lambda i, p, f: (0, 0)),              # all targets
            pl.BlockSpec((1, 1, tp), lambda i, p, f: (p, 0, 0)),       # tile targets
        ],
        out_specs=pl.BlockSpec((ta, _OUT_LANES), lambda i, p, f: (i, 0)),
        scratch_shapes=[
            pltpu.VMEM((ta, n), jnp.float32),   # masked exp(m - dist)
            pltpu.VMEM((ta, 1), jnp.float32),   # per-anchor positive max
            pltpu.VMEM((ta, n), jnp.float32),   # kept log-sum accumulator
            pltpu.VMEM((ta, n), jnp.float32),   # kept count accumulator
            pltpu.VMEM((ta, 1), jnp.float32),   # positive distance sum
            pltpu.VMEM((ta, 1), jnp.float32),   # negative distance sum
        ],
    )

    out = pl.pallas_call(
        _triplet_kernel,
        out_shape=jax.ShapeDtypeStruct((n, _OUT_LANES), jnp.float32),
        grid_spec=grid_spec,
        compiler_params=pltpu.CompilerParams(
            dimension_semantics=("parallel", "arbitrary"),
            vmem_limit_bytes=48 * 1024 * 1024,   # <= v7x's 64 MiB/TC; ample on v5e/v6e
        ),
        cost_estimate=pl.CostEstimate(                      # advisory, worst case (no sparsity)
            flops=int(2 * n * n * d + 6 * n * n * n),
            transcendentals=int(n * n * n + 2 * n * n),
            bytes_accessed=int(4 * n * d * (1 + a_tiles) + 512 * n),
        ),
    )(flags, x, x.reshape(p_tiles, tp, d), sq[:, None], sq[None, :],
      sq.reshape(p_tiles, 1, tp), t[:, None], t[None, :], t.reshape(p_tiles, 1, tp))

    losssum, count = out[:, 0], out[:, 1]
    possum, negsum = out[:, 2], out[:, 3]

    has_valid = count > 0.0
    per_anchor_mean = jnp.where(has_valid, losssum / jnp.maximum(count, 1.0), 0.0)
    total_kept = jnp.sum(count)
    loss = jnp.where(total_kept > 0.0,
                     jnp.sum(per_anchor_mean) / jnp.maximum(total_kept, 1.0), 0.0)
    accuracy = jnp.mean(jnp.logical_not(has_valid).astype(jnp.float32))

    num_pos = jnp.sum(pos_full.astype(jnp.float32))
    num_neg = jnp.sum(jnp.logical_not(same).astype(jnp.float32))
    pos_d = jnp.sum(possum) / jnp.maximum(num_pos, 1.0)
    neg_d = jnp.sum(negsum) / jnp.maximum(num_neg, 1.0)
    return loss, accuracy, pos_d, neg_d


def _triplet_reference(inputs, targets):
    """Pure-JAX reference with the literal Triplet.forward math (sanity check only)."""
    x = inputs.astype(jnp.float32)
    t = targets.astype(jnp.int32)
    n = x.shape[0]
    sq = jnp.sum(x * x, axis=1)
    dist = ALPHA * jnp.sqrt(jnp.maximum(sq[:, None] + sq[None, :] - 2.0 * (x @ x.T), EPS))
    same = t[:, None] == t[None, :]
    pos_m = jnp.logical_and(same, jnp.logical_not(jnp.eye(n, dtype=bool)))
    neg_m = jnp.logical_not(same)
    trip = jnp.log(jnp.exp(dist[:, :, None] - dist[:, None, :]) + 1.0)   # (a, pos, neg)
    keep = jnp.logical_and(jnp.logical_and(pos_m[:, :, None], neg_m[:, None, :]),
                           trip > MARGIN)
    cnt = jnp.sum(keep.astype(jnp.float32), axis=(1, 2))
    lsum = jnp.sum(jnp.where(keep, trip, 0.0), axis=(1, 2))
    per = jnp.where(cnt > 0, lsum / jnp.maximum(cnt, 1.0), 0.0)
    tot = jnp.sum(cnt)
    loss = jnp.where(tot > 0, jnp.sum(per) / jnp.maximum(tot, 1.0), 0.0)
    accuracy = jnp.mean((cnt == 0).astype(jnp.float32))
    pos_d = jnp.sum(jnp.where(pos_m, dist, 0.0)) / jnp.maximum(
        jnp.sum(pos_m.astype(jnp.float32)), 1.0)
    neg_d = jnp.sum(jnp.where(neg_m, dist, 0.0)) / jnp.maximum(
        jnp.sum(neg_m.astype(jnp.float32)), 1.0)
    return loss, accuracy, pos_d, neg_d


if __name__ == "__main__":
    key = jax.random.PRNGKey(0)
    n, d = 8, 32                                   # balanced batch: 2 identities x 4 instances
    inputs = jax.random.normal(key, (n, d), dtype=jnp.float32)
    targets = jnp.array([0, 0, 0, 0, 1, 1, 1, 1], dtype=jnp.int32)

    result = triplet_forward(inputs, targets)
    jax.block_until_ready(result)

    reference = _triplet_reference(inputs, targets)
    for got, want in zip(result, reference):
        assert np.allclose(np.asarray(got), np.asarray(want), rtol=1e-3, atol=1e-3), (got, want)

    print("KERNEL_OK")
</pallas_src>

<mosaic_0001>
module attributes {stable_mosaic.version = 11 : i64} {
  func.func @_triplet_kernel(%arg0: i32, %arg1: i32, %arg2: memref<1x1xi32, #tpu.memory_space<smem>>, %arg3: memref<8x32xf32, #tpu.memory_space<vmem>>, %arg4: memref<1x8x32xf32, #tpu.memory_space<vmem>>, %arg5: memref<8x1xf32, #tpu.memory_space<vmem>>, %arg6: memref<1x8xf32, #tpu.memory_space<vmem>>, %arg7: memref<1x1x8xf32, #tpu.memory_space<vmem>>, %arg8: memref<8x1xi32, #tpu.memory_space<vmem>>, %arg9: memref<1x8xi32, #tpu.memory_space<vmem>>, %arg10: memref<1x1x8xi32, #tpu.memory_space<vmem>>, %arg11: memref<8x128xf32, #tpu.memory_space<vmem>>, %arg12: memref<8x8xf32, #tpu.memory_space<vmem>>, %arg13: memref<8x1xf32, #tpu.memory_space<vmem>>, %arg14: memref<8x8xf32, #tpu.memory_space<vmem>>, %arg15: memref<8x8xf32, #tpu.memory_space<vmem>>, %arg16: memref<8x1xf32, #tpu.memory_space<vmem>>, %arg17: memref<8x1xf32, #tpu.memory_space<vmem>>) attributes {dimension_semantics = [#tpu.dimension_semantics<parallel>, #tpu.dimension_semantics<arbitrary>], iteration_bounds = array<i64: 1, 1>, scalar_prefetch = 1 : i64, scratch_operands = 6 : i64, tpu.core_type = #tpu.core_type<tc>, window_params = [{pipeline_mode = #tpu.pipeline_mode<synchronous>, transform_indices = @transform_0, window_bounds = array<i64: 8, 32>}, {transform_indices = @transform_1, window_bounds = array<i64: 1, 8, 32>}, {transform_indices = @transform_2, window_bounds = array<i64: 8, 1>}, {pipeline_mode = #tpu.pipeline_mode<synchronous>, transform_indices = @transform_3, window_bounds = array<i64: 1, 8>}, {transform_indices = @transform_4, window_bounds = array<i64: 1, 1, 8>}, {transform_indices = @transform_5, window_bounds = array<i64: 8, 1>}, {pipeline_mode = #tpu.pipeline_mode<synchronous>, transform_indices = @transform_6, window_bounds = array<i64: 1, 8>}, {transform_indices = @transform_7, window_bounds = array<i64: 1, 1, 8>}, {transform_indices = @transform_8, window_bounds = array<i64: 8, 128>}]} {
    %c8_i32 = arith.constant 8 : i32
    %0 = arith.muli %arg0, %c8_i32 : i32
    %1 = tpu.assume_multiple %0, 8 : i32
    %2 = arith.index_cast %1 : i32 to index
    %c0 = arith.constant 0 : index
    %3 = vector.load %arg3[%2, %c0] : memref<8x32xf32, #tpu.memory_space<vmem>>, vector<8x32xf32>
    %c0_0 = arith.constant 0 : index
    %c0_1 = arith.constant 0 : index
    %4 = vector.load %arg5[%c0_0, %c0_1] : memref<8x1xf32, #tpu.memory_space<vmem>>, vector<8x1xf32>
    %c0_2 = arith.constant 0 : index
    %c0_3 = arith.constant 0 : index
    %5 = vector.load %arg8[%c0_2, %c0_3] : memref<8x1xi32, #tpu.memory_space<vmem>>, vector<8x1xi32>
    %c0_i32 = arith.constant 0 : i32
    %6 = arith.cmpi eq, %arg1, %c0_i32 : i32
    %7 = arith.extui %6 : i1 to i32
    %c0_i32_4 = arith.constant 0 : i32
    %8 = arith.cmpi ne, %7, %c0_i32_4 : i32
    scf.if %8 {
      %c0_9 = arith.constant 0 : index
      %c0_10 = arith.constant 0 : index
      %18 = vector.load %arg3[%c0_9, %c0_10] : memref<8x32xf32, #tpu.memory_space<vmem>>, vector<8x32xf32>
      %cst = arith.constant dense<0.000000e+00> : vector<8x8xf32>
      %19 = tpu.matmul %3, %18, %cst {dimension_numbers = #tpu.dot_dimension_numbers<[1], [1], [0], [0], [0, 0, 1, 0], [], []>} : vector<8x32xf32>, vector<8x32xf32>, vector<8x8xf32> -> vector<8x8xf32>
      %c0_11 = arith.constant 0 : index
      %c0_12 = arith.constant 0 : index
      %20 = vector.load %arg6[%c0_11, %c0_12] : memref<1x8xf32, #tpu.memory_space<vmem>>, vector<1x8xf32>
      %21 = vector.broadcast %4 : vector<8x1xf32> to vector<8x8xf32>
      %22 = vector.broadcast %20 : vector<1x8xf32> to vector<8x8xf32>
      %23 = arith.addf %21, %22 : vector<8x8xf32>
      %cst_13 = arith.constant 2.000000e+00 : f32
      %24 = vector.broadcast %cst_13 : f32 to vector<8x8xf32>
      %25 = arith.mulf %24, %19 : vector<8x8xf32>
      %26 = arith.subf %23, %25 : vector<8x8xf32>
      %cst_14 = arith.constant 9.99999996E-13 : f32
      %27 = vector.broadcast %cst_14 : f32 to vector<8x8xf32>
      %28 = arith.maximumf %26, %27 : vector<8x8xf32>
      %29 = math.sqrt %28 : vector<8x8xf32>
      %cst_15 = arith.constant 4.000000e+00 : f32
      %30 = vector.broadcast %cst_15 : f32 to vector<8x8xf32>
      %31 = arith.mulf %30, %29 : vector<8x8xf32>
      %c0_16 = arith.constant 0 : index
      %c0_17 = arith.constant 0 : index
      %32 = vector.load %arg9[%c0_16, %c0_17] : memref<1x8xi32, #tpu.memory_space<vmem>>, vector<1x8xi32>
      %33 = vector.broadcast %5 : vector<8x1xi32> to vector<8x8xi32>
      %34 = vector.broadcast %32 : vector<1x8xi32> to vector<8x8xi32>
      %35 = arith.cmpi eq, %33, %34 : vector<8x8xi32>
      %36 = tpu.iota {dimensions = array<i32: 0>} : vector<8x8xi32>
      %37 = vector.broadcast %1 : i32 to vector<8x8xi32>
      %38 = arith.addi %37, %36 : vector<8x8xi32>
      %39 = tpu.iota {dimensions = array<i32: 1>} : vector<8x8xi32>
      %40 = arith.cmpi ne, %38, %39 : vector<8x8xi32>
      %41 = arith.andi %35, %40 : vector<8x8xi1>
      %cst_18 = arith.constant dense<true> : vector<8x8xi1>
      %42 = arith.xori %35, %cst_18 : vector<8x8xi1>
      %cst_19 = arith.constant 0.000000e+00 : f32
      %43 = vector.broadcast %cst_19 : f32 to vector<8x8xf32>
      %44 = arith.select %41, %31, %43 : vector<8x8xi1>, vector<8x8xf32>
      %cst_20 = arith.constant dense<0xFF800000> : vector<8xf32>
      %45 = vector.multi_reduction <maximumf>, %44, %cst_20 [1] : vector<8x8xf32> to vector<8xf32>
      %46 = vector.shape_cast %45 : vector<8xf32> to vector<8x1xf32>
      %c0_21 = arith.constant 0 : index
      %c0_22 = arith.constant 0 : index
      %47 = vector.load %arg13[%c0_21, %c0_22] : memref<8x1xf32, #tpu.memory_space<vmem>>, vector<8x1xf32>
      tpu.vector_store %arg13[%c0_21, %c0_22], %46 {strides = array<i32>} : memref<8x1xf32, #tpu.memory_space<vmem>>, vector<8x1xf32>,
      %48 = vector.broadcast %46 : vector<8x1xf32> to vector<8x8xf32>
      %49 = arith.subf %48, %31 : vector<8x8xf32>
      %50 = math.exp %49 : vector<8x8xf32>
      %cst_23 = arith.constant 0.000000e+00 : f32
      %51 = vector.broadcast %cst_23 : f32 to vector<8x8xf32>
      %52 = arith.select %42, %50, %51 : vector<8x8xi1>, vector<8x8xf32>
      %c0_24 = arith.constant 0 : index
      %c0_25 = arith.constant 0 : index
      %53 = vector.load %arg12[%c0_24, %c0_25] : memref<8x8xf32, #tpu.memory_space<vmem>>, vector<8x8xf32>
      tpu.vector_store %arg12[%c0_24, %c0_25], %52 {strides = array<i32>} : memref<8x8xf32, #tpu.memory_space<vmem>>, vector<8x8xf32>,
      %cst_26 = arith.constant 0.000000e+00 : f32
      %54 = vector.broadcast %cst_26 : f32 to vector<8x8xf32>
      %55 = arith.select %41, %31, %54 : vector<8x8xi1>, vector<8x8xf32>
      %cst_27 = arith.constant dense<0.000000e+00> : vector<8xf32>
      %56 = vector.multi_reduction <add>, %55, %cst_27 [1] : vector<8x8xf32> to vector<8xf32>
      %57 = vector.shape_cast %56 : vector<8xf32> to vector<8x1xf32>
      %c0_28 = arith.constant 0 : index
      %c0_29 = arith.constant 0 : index
      %58 = vector.load %arg16[%c0_28, %c0_29] : memref<8x1xf32, #tpu.memory_space<vmem>>, vector<8x1xf32>
      tpu.vector_store %arg16[%c0_28, %c0_29], %57 {strides = array<i32>} : memref<8x1xf32, #tpu.memory_space<vmem>>, vector<8x1xf32>,
      %cst_30 = arith.constant 0.000000e+00 : f32
      %59 = vector.broadcast %cst_30 : f32 to vector<8x8xf32>
      %60 = arith.select %42, %31, %59 : vector<8x8xi1>, vector<8x8xf32>
      %cst_31 = arith.constant dense<0.000000e+00> : vector<8xf32>
      %61 = vector.multi_reduction <add>, %60, %cst_31 [1] : vector<8x8xf32> to vector<8xf32>
      %62 = vector.shape_cast %61 : vector<8xf32> to vector<8x1xf32>
      %c0_32 = arith.constant 0 : index
      %c0_33 = arith.constant 0 : index
      %63 = vector.load %arg17[%c0_32, %c0_33] : memref<8x1xf32, #tpu.memory_space<vmem>>, vector<8x1xf32>
      tpu.vector_store %arg17[%c0_32, %c0_33], %62 {strides = array<i32>} : memref<8x1xf32, #tpu.memory_space<vmem>>, vector<8x1xf32>,
      %cst_34 = arith.constant 0.000000e+00 : f32
      %64 = vector.broadcast %cst_34 : f32 to vector<8x8xf32>
      %c0_35 = arith.constant 0 : index
      %c0_36 = arith.constant 0 : index
      %65 = vector.load %arg14[%c0_35, %c0_36] : memref<8x8xf32, #tpu.memory_space<vmem>>, vector<8x8xf32>
      tpu.vector_store %arg14[%c0_35, %c0_36], %64 {strides = array<i32>} : memref<8x8xf32, #tpu.memory_space<vmem>>, vector<8x8xf32>,
      %cst_37 = arith.constant 0.000000e+00 : f32
      %66 = vector.broadcast %cst_37 : f32 to vector<8x8xf32>
      %c0_38 = arith.constant 0 : index
      %c0_39 = arith.constant 0 : index
      %67 = vector.load %arg15[%c0_38, %c0_39] : memref<8x8xf32, #tpu.memory_space<vmem>>, vector<8x8xf32>
      tpu.vector_store %arg15[%c0_38, %c0_39], %66 {strides = array<i32>} : memref<8x8xf32, #tpu.memory_space<vmem>>, vector<8x8xf32>,
    } else {
    }
    %9 = arith.index_cast %arg0 : i32 to index
    %10 = arith.index_cast %arg1 : i32 to index
    %11 = memref.load %arg2[%9, %10] : memref<1x1xi32, #tpu.memory_space<smem>>
    %c0_i32_5 = arith.constant 0 : i32
    %12 = arith.cmpi ne, %11, %c0_i32_5 : i32
    %13 = arith.extui %12 : i1 to i32
    %c0_i32_6 = arith.constant 0 : i32
    %14 = arith.cmpi ne, %13, %c0_i32_6 : i32
    scf.if %14 {
      %c0_9 = arith.constant 0 : index
      %c0_10 = arith.constant 0 : index
      %c0_11 = arith.constant 0 : index
      %18 = vector.load %arg4[%c0_9, %c0_10, %c0_11] : memref<1x8x32xf32, #tpu.memory_space<vmem>>, vector<1x8x32xf32>
      %19 = vector.shape_cast %18 : vector<1x8x32xf32> to vector<8x32xf32>
      %cst = arith.constant dense<0.000000e+00> : vector<8x8xf32>
      %20 = tpu.matmul %3, %19, %cst {dimension_numbers = #tpu.dot_dimension_numbers<[1], [1], [0], [0], [0, 0, 1, 0], [], []>} : vector<8x32xf32>, vector<8x32xf32>, vector<8x8xf32> -> vector<8x8xf32>
      %c0_12 = arith.constant 0 : index
      %c0_13 = arith.constant 0 : index
      %c0_14 = arith.constant 0 : index
      %21 = vector.load %arg7[%c0_12, %c0_13, %c0_14] : memref<1x1x8xf32, #tpu.memory_space<vmem>>, vector<1x1x8xf32>
      %22 = vector.shape_cast %21 : vector<1x1x8xf32> to vector<1x8xf32>
      %23 = vector.broadcast %4 : vector<8x1xf32> to vector<8x8xf32>
      %24 = vector.broadcast %22 : vector<1x8xf32> to vector<8x8xf32>
      %25 = arith.addf %23, %24 : vector<8x8xf32>
      %cst_15 = arith.constant 2.000000e+00 : f32
      %26 = vector.broadcast %cst_15 : f32 to vector<8x8xf32>
      %27 = arith.mulf %26, %20 : vector<8x8xf32>
      %28 = arith.subf %25, %27 : vector<8x8xf32>
      %cst_16 = arith.constant 9.99999996E-13 : f32
      %29 = vector.broadcast %cst_16 : f32 to vector<8x8xf32>
      %30 = arith.maximumf %28, %29 : vector<8x8xf32>
      %31 = math.sqrt %30 : vector<8x8xf32>
      %cst_17 = arith.constant 4.000000e+00 : f32
      %32 = vector.broadcast %cst_17 : f32 to vector<8x8xf32>
      %33 = arith.mulf %32, %31 : vector<8x8xf32>
      %c0_18 = arith.constant 0 : index
      %c0_19 = arith.constant 0 : index
      %c0_20 = arith.constant 0 : index
      %34 = vector.load %arg10[%c0_18, %c0_19, %c0_20] : memref<1x1x8xi32, #tpu.memory_space<vmem>>, vector<1x1x8xi32>
      %35 = vector.shape_cast %34 : vector<1x1x8xi32> to vector<1x8xi32>
      %36 = vector.broadcast %5 : vector<8x1xi32> to vector<8x8xi32>
      %37 = vector.broadcast %35 : vector<1x8xi32> to vector<8x8xi32>
      %38 = arith.cmpi eq, %36, %37 : vector<8x8xi32>
      %39 = tpu.iota {dimensions = array<i32: 0>} : vector<8x8xi32>
      %40 = vector.broadcast %1 : i32 to vector<8x8xi32>
      %41 = arith.addi %40, %39 : vector<8x8xi32>
      %c8_i32_21 = arith.constant 8 : i32
      %42 = arith.muli %arg1, %c8_i32_21 : i32
      %43 = tpu.iota {dimensions = array<i32: 1>} : vector<8x8xi32>
      %44 = vector.broadcast %42 : i32 to vector<8x8xi32>
      %45 = arith.addi %44, %43 : vector<8x8xi32>
      %46 = arith.cmpi ne, %41, %45 : vector<8x8xi32>
      %47 = arith.andi %38, %46 : vector<8x8xi1>
      %c0_22 = arith.constant 0 : index
      %c0_23 = arith.constant 0 : index
      %48 = vector.load %arg13[%c0_22, %c0_23] : memref<8x1xf32, #tpu.memory_space<vmem>>, vector<8x1xf32>
      %49 = vector.broadcast %48 : vector<8x1xf32> to vector<8x8xf32>
      %50 = arith.subf %33, %49 : vector<8x8xf32>
      %51 = math.exp %50 : vector<8x8xf32>
      %cst_24 = arith.constant 0.000000e+00 : f32
      %52 = vector.broadcast %cst_24 : f32 to vector<8x8xf32>
      %53 = arith.select %47, %51, %52 : vector<8x8xi1>, vector<8x8xf32>
      %c0_25 = arith.constant 0 : index
      %c0_26 = arith.constant 0 : index
      %54 = vector.load %arg12[%c0_25, %c0_26] : memref<8x8xf32, #tpu.memory_space<vmem>>, vector<8x8xf32>
      %cst_27 = arith.constant 0.000000e+00 : f32
      %55 = vector.broadcast %cst_27 : f32 to vector<8x8xf32>
      %cst_28 = arith.constant 0.000000e+00 : f32
      %56 = vector.broadcast %cst_28 : f32 to vector<8x8xf32>
      %57 = vector.extract_strided_slice %53 {offsets = [0, 0], sizes = [8, 1], strides = [1, 1]} : vector<8x8xf32> to vector<8x1xf32>
      %58 = vector.broadcast %57 : vector<8x1xf32> to vector<8x8xf32>
      %59 = arith.mulf %58, %54 : vector<8x8xf32>
      %cst_29 = arith.constant 1.0137527 : f32
      %60 = vector.broadcast %cst_29 : f32 to vector<8x8xf32>
      %61 = arith.cmpf ogt, %59, %60 : vector<8x8xf32>
      %cst_30 = arith.constant 1.000000e+00 : f32
      %62 = vector.broadcast %cst_30 : f32 to vector<8x8xf32>
      %63 = arith.addf %59, %62 : vector<8x8xf32>
      %64 = math.log %63 : vector<8x8xf32>
      %cst_31 = arith.constant 0.000000e+00 : f32
      %65 = vector.broadcast %cst_31 : f32 to vector<8x8xf32>
      %66 = arith.select %61, %64, %65 : vector<8x8xi1>, vector<8x8xf32>
      %67 = arith.addf %55, %66 : vector<8x8xf32>
      %cst_32 = arith.constant 1.000000e+00 : f32
      %cst_33 = arith.constant 0.000000e+00 : f32
      %68 = vector.broadcast %cst_32 : f32 to vector<8x8xf32>
      %69 = vector.broadcast %cst_33 : f32 to vector<8x8xf32>
      %70 = arith.select %61, %68, %69 : vector<8x8xi1>, vector<8x8xf32>
      %71 = arith.addf %56, %70 : vector<8x8xf32>
      %72 = vector.extract_strided_slice %53 {offsets = [0, 1], sizes = [8, 1], strides = [1, 1]} : vector<8x8xf32> to vector<8x1xf32>
      %73 = vector.broadcast %72 : vector<8x1xf32> to vector<8x8xf32>
      %74 = arith.mulf %73, %54 : vector<8x8xf32>
      %cst_34 = arith.constant 1.0137527 : f32
      %75 = vector.broadcast %cst_34 : f32 to vector<8x8xf32>
      %76 = arith.cmpf ogt, %74, %75 : vector<8x8xf32>
      %cst_35 = arith.constant 1.000000e+00 : f32
      %77 = vector.broadcast %cst_35 : f32 to vector<8x8xf32>
      %78 = arith.addf %74, %77 : vector<8x8xf32>
      %79 = math.log %78 : vector<8x8xf32>
      %cst_36 = arith.constant 0.000000e+00 : f32
      %80 = vector.broadcast %cst_36 : f32 to vector<8x8xf32>
      %81 = arith.select %76, %79, %80 : vector<8x8xi1>, vector<8x8xf32>
      %82 = arith.addf %67, %81 : vector<8x8xf32>
      %cst_37 = arith.constant 1.000000e+00 : f32
      %cst_38 = arith.constant 0.000000e+00 : f32
      %83 = vector.broadcast %cst_37 : f32 to vector<8x8xf32>
      %84 = vector.broadcast %cst_38 : f32 to vector<8x8xf32>
      %85 = arith.select %76, %83, %84 : vector<8x8xi1>, vector<8x8xf32>
      %86 = arith.addf %71, %85 : vector<8x8xf32>
      %87 = vector.extract_strided_slice %53 {offsets = [0, 2], sizes = [8, 1], strides = [1, 1]} : vector<8x8xf32> to vector<8x1xf32>
      %88 = vector.broadcast %87 : vector<8x1xf32> to vector<8x8xf32>
      %89 = arith.mulf %88, %54 : vector<8x8xf32>
      %cst_39 = arith.constant 1.0137527 : f32
      %90 = vector.broadcast %cst_39 : f32 to vector<8x8xf32>
      %91 = arith.cmpf ogt, %89, %90 : vector<8x8xf32>
      %cst_40 = arith.constant 1.000000e+00 : f32
      %92 = vector.broadcast %cst_40 : f32 to vector<8x8xf32>
      %93 = arith.addf %89, %92 : vector<8x8xf32>
      %94 = math.log %93 : vector<8x8xf32>
      %cst_41 = arith.constant 0.000000e+00 : f32
      %95 = vector.broadcast %cst_41 : f32 to vector<8x8xf32>
      %96 = arith.select %91, %94, %95 : vector<8x8xi1>, vector<8x8xf32>
      %97 = arith.addf %82, %96 : vector<8x8xf32>
      %cst_42 = arith.constant 1.000000e+00 : f32
      %cst_43 = arith.constant 0.000000e+00 : f32
      %98 = vector.broadcast %cst_42 : f32 to vector<8x8xf32>
      %99 = vector.broadcast %cst_43 : f32 to vector<8x8xf32>
      %100 = arith.select %91, %98, %99 : vector<8x8xi1>, vector<8x8xf32>
      %101 = arith.addf %86, %100 : vector<8x8xf32>
      %102 = vector.extract_strided_slice %53 {offsets = [0, 3], sizes = [8, 1], strides = [1, 1]} : vector<8x8xf32> to vector<8x1xf32>
      %103 = vector.broadcast %102 : vector<8x1xf32> to vector<8x8xf32>
      %104 = arith.mulf %103, %54 : vector<8x8xf32>
      %cst_44 = arith.constant 1.0137527 : f32
      %105 = vector.broadcast %cst_44 : f32 to vector<8x8xf32>
      %106 = arith.cmpf ogt, %104, %105 : vector<8x8xf32>
      %cst_45 = arith.constant 1.000000e+00 : f32
      %107 = vector.broadcast %cst_45 : f32 to vector<8x8xf32>
      %108 = arith.addf %104, %107 : vector<8x8xf32>
      %109 = math.log %108 : vector<8x8xf32>
      %cst_46 = arith.constant 0.000000e+00 : f32
      %110 = vector.broadcast %cst_46 : f32 to vector<8x8xf32>
      %111 = arith.select %106, %109, %110 : vector<8x8xi1>, vector<8x8xf32>
      %112 = arith.addf %97, %111 : vector<8x8xf32>
      %cst_47 = arith.constant 1.000000e+00 : f32
      %cst_48 = arith.constant 0.000000e+00 : f32
      %113 = vector.broadcast %cst_47 : f32 to vector<8x8xf32>
      %114 = vector.broadcast %cst_48 : f32 to vector<8x8xf32>
      %115 = arith.select %106, %113, %114 : vector<8x8xi1>, vector<8x8xf32>
      %116 = arith.addf %101, %115 : vector<8x8xf32>
      %117 = vector.extract_strided_slice %53 {offsets = [0, 4], sizes = [8, 1], strides = [1, 1]} : vector<8x8xf32> to vector<8x1xf32>
      %118 = vector.broadcast %117 : vector<8x1xf32> to vector<8x8xf32>
      %119 = arith.mulf %118, %54 : vector<8x8xf32>
      %cst_49 = arith.constant 1.0137527 : f32
      %120 = vector.broadcast %cst_49 : f32 to vector<8x8xf32>
      %121 = arith.cmpf ogt, %119, %120 : vector<8x8xf32>
      %cst_50 = arith.constant 1.000000e+00 : f32
      %122 = vector.broadcast %cst_50 : f32 to vector<8x8xf32>
      %123 = arith.addf %119, %122 : vector<8x8xf32>
      %124 = math.log %123 : vector<8x8xf32>
      %cst_51 = arith.constant 0.000000e+00 : f32
      %125 = vector.broadcast %cst_51 : f32 to vector<8x8xf32>
      %126 = arith.select %121, %124, %125 : vector<8x8xi1>, vector<8x8xf32>
      %127 = arith.addf %112, %126 : vector<8x8xf32>
      %cst_52 = arith.constant 1.000000e+00 : f32
      %cst_53 = arith.constant 0.000000e+00 : f32
      %128 = vector.broadcast %cst_52 : f32 to vector<8x8xf32>
      %129 = vector.broadcast %cst_53 : f32 to vector<8x8xf32>
      %130 = arith.select %121, %128, %129 : vector<8x8xi1>, vector<8x8xf32>
      %131 = arith.addf %116, %130 : vector<8x8xf32>
      %132 = vector.extract_strided_slice %53 {offsets = [0, 5], sizes = [8, 1], strides = [1, 1]} : vector<8x8xf32> to vector<8x1xf32>
      %133 = vector.broadcast %132 : vector<8x1xf32> to vector<8x8xf32>
      %134 = arith.mulf %133, %54 : vector<8x8xf32>
      %cst_54 = arith.constant 1.0137527 : f32
      %135 = vector.broadcast %cst_54 : f32 to vector<8x8xf32>
      %136 = arith.cmpf ogt, %134, %135 : vector<8x8xf32>
      %cst_55 = arith.constant 1.000000e+00 : f32
      %137 = vector.broadcast %cst_55 : f32 to vector<8x8xf32>
      %138 = arith.addf %134, %137 : vector<8x8xf32>
      %139 = math.log %138 : vector<8x8xf32>
      %cst_56 = arith.constant 0.000000e+00 : f32
      %140 = vector.broadcast %cst_56 : f32 to vector<8x8xf32>
      %141 = arith.select %136, %139, %140 : vector<8x8xi1>, vector<8x8xf32>
      %142 = arith.addf %127, %141 : vector<8x8xf32>
      %cst_57 = arith.constant 1.000000e+00 : f32
      %cst_58 = arith.constant 0.000000e+00 : f32
      %143 = vector.broadcast %cst_57 : f32 to vector<8x8xf32>
      %144 = vector.broadcast %cst_58 : f32 to vector<8x8xf32>
      %145 = arith.select %136, %143, %144 : vector<8x8xi1>, vector<8x8xf32>
      %146 = arith.addf %131, %145 : vector<8x8xf32>
      %147 = vector.extract_strided_slice %53 {offsets = [0, 6], sizes = [8, 1], strides = [1, 1]} : vector<8x8xf32> to vector<8x1xf32>
      %148 = vector.broadcast %147 : vector<8x1xf32> to vector<8x8xf32>
      %149 = arith.mulf %148, %54 : vector<8x8xf32>
      %cst_59 = arith.constant 1.0137527 : f32
      %150 = vector.broadcast %cst_59 : f32 to vector<8x8xf32>
      %151 = arith.cmpf ogt, %149, %150 : vector<8x8xf32>
      %cst_60 = arith.constant 1.000000e+00 : f32
      %152 = vector.broadcast %cst_60 : f32 to vector<8x8xf32>
      %153 = arith.addf %149, %152 : vector<8x8xf32>
      %154 = math.log %153 : vector<8x8xf32>
      %cst_61 = arith.constant 0.000000e+00 : f32
      %155 = vector.broadcast %cst_61 : f32 to vector<8x8xf32>
      %156 = arith.select %151, %154, %155 : vector<8x8xi1>, vector<8x8xf32>
      %157 = arith.addf %142, %156 : vector<8x8xf32>
      %cst_62 = arith.constant 1.000000e+00 : f32
      %cst_63 = arith.constant 0.000000e+00 : f32
      %158 = vector.broadcast %cst_62 : f32 to vector<8x8xf32>
      %159 = vector.broadcast %cst_63 : f32 to vector<8x8xf32>
      %160 = arith.select %151, %158, %159 : vector<8x8xi1>, vector<8x8xf32>
      %161 = arith.addf %146, %160 : vector<8x8xf32>
      %162 = vector.extract_strided_slice %53 {offsets = [0, 7], sizes = [8, 1], strides = [1, 1]} : vector<8x8xf32> to vector<8x1xf32>
      %163 = vector.broadcast %162 : vector<8x1xf32> to vector<8x8xf32>
      %164 = arith.mulf %163, %54 : vector<8x8xf32>
      %cst_64 = arith.constant 1.0137527 : f32
      %165 = vector.broadcast %cst_64 : f32 to vector<8x8xf32>
      %166 = arith.cmpf ogt, %164, %165 : vector<8x8xf32>
      %cst_65 = arith.constant 1.000000e+00 : f32
      %167 = vector.broadcast %cst_65 : f32 to vector<8x8xf32>
      %168 = arith.addf %164, %167 : vector<8x8xf32>
      %169 = math.log %168 : vector<8x8xf32>
      %cst_66 = arith.constant 0.000000e+00 : f32
      %170 = vector.broadcast %cst_66 : f32 to vector<8x8xf32>
      %171 = arith.select %166, %169, %170 : vector<8x8xi1>, vector<8x8xf32>
      %172 = arith.addf %157, %171 : vector<8x8xf32>
      %cst_67 = arith.constant 1.000000e+00 : f32
      %cst_68 = arith.constant 0.000000e+00 : f32
      %173 = vector.broadcast %cst_67 : f32 to vector<8x8xf32>
      %174 = vector.broadcast %cst_68 : f32 to vector<8x8xf32>
      %175 = arith.select %166, %173, %174 : vector<8x8xi1>, vector<8x8xf32>
      %176 = arith.addf %161, %175 : vector<8x8xf32>
      %c0_69 = arith.constant 0 : index
      %c0_70 = arith.constant 0 : index
      %177 = vector.load %arg14[%c0_69, %c0_70] : memref<8x8xf32, #tpu.memory_space<vmem>>, vector<8x8xf32>
      %178 = arith.addf %177, %172 : vector<8x8xf32>
      %c0_71 = arith.constant 0 : index
      %c0_72 = arith.constant 0 : index
      %179 = vector.load %arg14[%c0_71, %c0_72] : memref<8x8xf32, #tpu.memory_space<vmem>>, vector<8x8xf32>
      tpu.vector_store %arg14[%c0_71, %c0_72], %178 {strides = array<i32>} : memref<8x8xf32, #tpu.memory_space<vmem>>, vector<8x8xf32>,
      %c0_73 = arith.constant 0 : index
      %c0_74 = arith.constant 0 : index
      %180 = vector.load %arg15[%c0_73, %c0_74] : memref<8x8xf32, #tpu.memory_space<vmem>>, vector<8x8xf32>
      %181 = arith.addf %180, %176 : vector<8x8xf32>
      %c0_75 = arith.constant 0 : index
      %c0_76 = arith.constant 0 : index
      %182 = vector.load %arg15[%c0_75, %c0_76] : memref<8x8xf32, #tpu.memory_space<vmem>>, vector<8x8xf32>
      tpu.vector_store %arg15[%c0_75, %c0_76], %181 {strides = array<i32>} : memref<8x8xf32, #tpu.memory_space<vmem>>, vector<8x8xf32>,
    } else {
    }
    %c0_i32_7 = arith.constant 0 : i32
    %15 = arith.cmpi eq, %arg1, %c0_i32_7 : i32
    %16 = arith.extui %15 : i1 to i32
    %c0_i32_8 = arith.constant 0 : i32
    %17 = arith.cmpi ne, %16, %c0_i32_8 : i32
    scf.if %17 {
      %c0_9 = arith.constant 0 : index
      %c0_10 = arith.constant 0 : index
      %18 = vector.load %arg14[%c0_9, %c0_10] : memref<8x8xf32, #tpu.memory_space<vmem>>, vector<8x8xf32>
      %cst = arith.constant dense<0.000000e+00> : vector<8xf32>
      %19 = vector.multi_reduction <add>, %18, %cst [1] : vector<8x8xf32> to vector<8xf32>
      %20 = vector.shape_cast %19 : vector<8xf32> to vector<8x1xf32>
      %c0_11 = arith.constant 0 : index
      %c0_12 = arith.constant 0 : index
      %21 = vector.load %arg15[%c0_11, %c0_12] : memref<8x8xf32, #tpu.memory_space<vmem>>, vector<8x8xf32>
      %cst_13 = arith.constant dense<0.000000e+00> : vector<8xf32>
      %22 = vector.multi_reduction <add>, %21, %cst_13 [1] : vector<8x8xf32> to vector<8xf32>
      %23 = vector.shape_cast %22 : vector<8xf32> to vector<8x1xf32>
      %24 = tpu.iota {dimensions = array<i32: 1>} : vector<8x128xi32>
      %c0_i32_14 = arith.constant 0 : i32
      %25 = vector.broadcast %c0_i32_14 : i32 to vector<8x128xi32>
      %26 = arith.cmpi eq, %24, %25 : vector<8x128xi32>
      %cst_15 = arith.constant 0.000000e+00 : f32
      %27 = vector.shape_cast %20 : vector<8x1xf32> to vector<8x1xf32>
      %28 = vector.broadcast %27 : vector<8x1xf32> to vector<8x128xf32>
      %29 = vector.broadcast %cst_15 : f32 to vector<8x128xf32>
      %30 = arith.select %26, %28, %29 : vector<8x128xi1>, vector<8x128xf32>
      %c1_i32 = arith.constant 1 : i32
      %31 = vector.broadcast %c1_i32 : i32 to vector<8x128xi32>
      %32 = arith.cmpi eq, %24, %31 : vector<8x128xi32>
      %cst_16 = arith.constant 0.000000e+00 : f32
      %33 = vector.shape_cast %23 : vector<8x1xf32> to vector<8x1xf32>
      %34 = vector.broadcast %33 : vector<8x1xf32> to vector<8x128xf32>
      %35 = vector.broadcast %cst_16 : f32 to vector<8x128xf32>
      %36 = arith.select %32, %34, %35 : vector<8x128xi1>, vector<8x128xf32>
      %37 = arith.addf %30, %36 : vector<8x128xf32>
      %c2_i32 = arith.constant 2 : i32
      %38 = vector.broadcast %c2_i32 : i32 to vector<8x128xi32>
      %39 = arith.cmpi eq, %24, %38 : vector<8x128xi32>
      %c0_17 = arith.constant 0 : index
      %c0_18 = arith.constant 0 : index
      %40 = vector.load %arg16[%c0_17, %c0_18] : memref<8x1xf32, #tpu.memory_space<vmem>>, vector<8x1xf32>
      %cst_19 = arith.constant 0.000000e+00 : f32
      %41 = vector.shape_cast %40 : vector<8x1xf32> to vector<8x1xf32>
      %42 = vector.broadcast %41 : vector<8x1xf32> to vector<8x128xf32>
      %43 = vector.broadcast %cst_19 : f32 to vector<8x128xf32>
      %44 = arith.select %39, %42, %43 : vector<8x128xi1>, vector<8x128xf32>
      %45 = arith.addf %37, %44 : vector<8x128xf32>
      %c3_i32 = arith.constant 3 : i32
      %46 = vector.broadcast %c3_i32 : i32 to vector<8x128xi32>
      %47 = arith.cmpi eq, %24, %46 : vector<8x128xi32>
      %c0_20 = arith.constant 0 : index
      %c0_21 = arith.constant 0 : index
      %48 = vector.load %arg17[%c0_20, %c0_21] : memref<8x1xf32, #tpu.memory_space<vmem>>, vector<8x1xf32>
      %cst_22 = arith.constant 0.000000e+00 : f32
      %49 = vector.shape_cast %48 : vector<8x1xf32> to vector<8x1xf32>
      %50 = vector.broadcast %49 : vector<8x1xf32> to vector<8x128xf32>
      %51 = vector.broadcast %cst_22 : f32 to vector<8x128xf32>
      %52 = arith.select %47, %50, %51 : vector<8x128xi1>, vector<8x128xf32>
      %53 = arith.addf %45, %52 : vector<8x128xf32>
      %c0_23 = arith.constant 0 : index
      %c0_24 = arith.constant 0 : index
      %54 = vector.load %arg11[%c0_23, %c0_24] : memref<8x128xf32, #tpu.memory_space<vmem>>, vector<8x128xf32>
      tpu.vector_store %arg11[%c0_23, %c0_24], %53 {strides = array<i32>} : memref<8x128xf32, #tpu.memory_space<vmem>>, vector<8x128xf32>,
    } else {
    }
    return
  }
  func.func @transform_0(%arg0: i32, %arg1: i32, %arg2: memref<1x1xi32, #tpu.memory_space<smem>>) -> (i32, i32) {
    %c0_i32 = arith.constant 0 : i32
    %c0_i32_0 = arith.constant 0 : i32
    %c0_i32_1 = arith.constant 0 : i32
    return %c0_i32, %c0_i32_0 : i32, i32
  }
  func.func @transform_1(%arg0: i32, %arg1: i32, %arg2: memref<1x1xi32, #tpu.memory_space<smem>>) -> (i32, i32, i32) {
    %c0_i32 = arith.constant 0 : i32
    %c0_i32_0 = arith.constant 0 : i32
    %c0_i32_1 = arith.constant 0 : i32
    return %arg1, %c0_i32, %c0_i32_0 : i32, i32, i32
  }
  func.func @transform_2(%arg0: i32, %arg1: i32, %arg2: memref<1x1xi32, #tpu.memory_space<smem>>) -> (i32, i32) {
    %c0_i32 = arith.constant 0 : i32
    %c0_i32_0 = arith.constant 0 : i32
    return %arg0, %c0_i32 : i32, i32
  }
  func.func @transform_3(%arg0: i32, %arg1: i32, %arg2: memref<1x1xi32, #tpu.memory_space<smem>>) -> (i32, i32) {
    %c0_i32 = arith.constant 0 : i32
    %c0_i32_0 = arith.constant 0 : i32
    %c0_i32_1 = arith.constant 0 : i32
    return %c0_i32, %c0_i32_0 : i32, i32
  }
  func.func @transform_4(%arg0: i32, %arg1: i32, %arg2: memref<1x1xi32, #tpu.memory_space<smem>>) -> (i32, i32, i32) {
    %c0_i32 = arith.constant 0 : i32
    %c0_i32_0 = arith.constant 0 : i32
    %c0_i32_1 = arith.constant 0 : i32
    return %arg1, %c0_i32, %c0_i32_0 : i32, i32, i32
  }
  func.func @transform_5(%arg0: i32, %arg1: i32, %arg2: memref<1x1xi32, #tpu.memory_space<smem>>) -> (i32, i32) {
    %c0_i32 = arith.constant 0 : i32
    %c0_i32_0 = arith.constant 0 : i32
    return %arg0, %c0_i32 : i32, i32
  }
  func.func @transform_6(%arg0: i32, %arg1: i32, %arg2: memref<1x1xi32, #tpu.memory_space<smem>>) -> (i32, i32) {
    %c0_i32 = arith.constant 0 : i32
    %c0_i32_0 = arith.constant 0 : i32
    %c0_i32_1 = arith.constant 0 : i32
    return %c0_i32, %c0_i32_0 : i32, i32
  }
  func.func @transform_7(%arg0: i32, %arg1: i32, %arg2: memref<1x1xi32, #tpu.memory_space<smem>>) -> (i32, i32, i32) {
    %c0_i32 = arith.constant 0 : i32
    %c0_i32_0 = arith.constant 0 : i32
    %c0_i32_1 = arith.constant 0 : i32
    return %arg1, %c0_i32, %c0_i32_0 : i32, i32, i32
  }
  func.func @transform_8(%arg0: i32, %arg1: i32, %arg2: memref<1x1xi32, #tpu.memory_space<smem>>) -> (i32, i32) {
    %c0_i32 = arith.constant 0 : i32
    %c0_i32_0 = arith.constant 0 : i32
    return %arg0, %c0_i32 : i32, i32
  }
}

</mosaic_0001>

<llo_original>
// kernel: tpu_custom_call.1
$region0: #{tpu_custom_call.1}
  #allocation0 [shape = 'u32[]', space=smem, size = 0x4, offset = 0x4, fixed_abs, tag = 'smem constant byte address 0x4 - core index']
  #allocation1 [shape = 'u32[72,128]{1,0:T(1,128)}', space=vmem, size = 0x9000, scoped, tag = 'internal scratch']
  #allocation2 [shape = 'f32[8,8]{1,0:T(8,128)}', space=vmem, size = 0x1000, scoped, tag = 'scratch operand']
  #allocation3 [shape = 'f32[8,1]{1,0:T(8,128)}', space=vmem, size = 0x1000, scoped, tag = 'scratch operand']
  #allocation4 [shape = 'f32[8,8]{1,0:T(8,128)}', space=vmem, size = 0x1000, scoped, tag = 'scratch operand']
  #allocation5 [shape = 'f32[8,8]{1,0:T(8,128)}', space=vmem, size = 0x1000, scoped, tag = 'scratch operand']
  #allocation6 [shape = 'f32[8,1]{1,0:T(8,128)}', space=vmem, size = 0x1000, scoped, tag = 'scratch operand']
  #allocation7 [shape = 'f32[8,1]{1,0:T(8,128)}', space=vmem, size = 0x1000, scoped, tag = 'scratch operand']
  #allocation8 [shape = 's32[1]{0}', space=sflag, size = 0x4, scoped, tag = 'scoped memory for tpu_custom_call.1']
  #allocation9 [shape = 's32[1,1]{1,0:T(1,128)S(6)}', space=smem, size = 0x200, scoped, tag = 'prefetched SMEM operand 0']
  %s0 = inlined_call_operand.<no memory space> [shape: s32[1,1], index: 0, kind: input, shape index: {}]
  %s1 = inlined_call_operand.vmem [shape: f32[8,32], index: 1, kind: input, shape index: {}]
  %s2 = inlined_call_operand.vmem [shape: f32[1,8,32], index: 2, kind: input, shape index: {}]
  %s3 = inlined_call_operand.vmem [shape: f32[8,1], index: 3, kind: input, shape index: {}]
  %s4 = inlined_call_operand.vmem [shape: f32[1,8], index: 4, kind: input, shape index: {}]
  %s5 = inlined_call_operand.vmem [shape: f32[1,1,8], index: 5, kind: input, shape index: {}]
  %s6 = inlined_call_operand.vmem [shape: s32[8,1], index: 6, kind: input, shape index: {}]
  %s7 = inlined_call_operand.vmem [shape: s32[1,8], index: 7, kind: input, shape index: {}]
  %s8 = inlined_call_operand.vmem [shape: s32[1,1,8], index: 8, kind: input, shape index: {}]
  %s9 = inlined_call_operand.hbm [shape: f32[8,128], index: 9, kind: output, shape index: {}]
  %s10 = sld [smem:[#allocation0]]
  $region54: #{tpu_custom_call.1} parent=0
    _
  %s12 = ssub.s32 1, %s10
  %s13 = scalar_select 0, %s12, %s10
  %14 = sst [smem:[#allocation9]] %s0
  $region1: #{tpu_custom_call.1} parent=0
    #allocation10 [shape = 'u8[4096]{0}', space=vmem, size = 0x1000, scoped, tag = 'output window, operand 0, single buffered']
    #allocation11 [shape = 's32[1]{0}', space=sflag, size = 0x4, scoped, tag = 'scoped memory for tpu_custom_call.1']
    %15 = vsyncpa [#allocation11], 0
    // Predicated region
    $region2: #{tpu_custom_call.1} parent=1 // pred_check
      _
    $region3: #{tpu_custom_call.1} parent=1 // pred_check_branch
      %17 = sbr.rel (0) target = $region5
    $region4: #{tpu_custom_call.1} parent=1 // pred_region
      _
    $region5: #{tpu_custom_call.1} parent=1 // pred_fallthru
      _
    // Predicated region
    $region6: #{tpu_custom_call.1} parent=1 // pred_check
      _
    $region7: #{tpu_custom_call.1} parent=1 // pred_check_branch
      %19 = sbr.rel (0) target = $region9
    $region8: #{tpu_custom_call.1} parent=1 // pred_region
      _
    $region9: #{tpu_custom_call.1} parent=1 // pred_fallthru
      _
    // Predicated region
    $region10: #{tpu_custom_call.1} parent=1 // pred_check
      _
    $region11: #{tpu_custom_call.1} parent=1 // pred_check_branch
      %21 = sbr.rel (0) target = $region13
    $region12: #{tpu_custom_call.1} parent=1 // pred_region
      _
    $region13: #{tpu_custom_call.1} parent=1 // pred_fallthru
      _
    // Predicated region
    $region14: #{tpu_custom_call.1} parent=1 // pred_check
      _
    $region15: #{tpu_custom_call.1} parent=1 // pred_check_branch
      %23 = sbr.rel (0) target = $region17
    $region16: #{tpu_custom_call.1} parent=1 // pred_region
      _
    $region17: #{tpu_custom_call.1} parent=1 // pred_fallthru
      _
    // Predicated region
    $region18: #{tpu_custom_call.1} parent=1 // pred_check
      _
    $region19: #{tpu_custom_call.1} parent=1 // pred_check_branch
      %25 = sbr.rel (0) target = $region21
    $region20: #{tpu_custom_call.1} parent=1 // pred_region
      _
    $region21: #{tpu_custom_call.1} parent=1 // pred_fallthru
      _
    // Predicated region
    $region22: #{tpu_custom_call.1} parent=1 // pred_check
      _
    $region23: #{tpu_custom_call.1} parent=1 // pred_check_branch
      %27 = sbr.rel (0) target = $region25
    $region24: #{tpu_custom_call.1} parent=1 // pred_region
      _
    $region25: #{tpu_custom_call.1} parent=1 // pred_fallthru
      _
    // Predicated region
    $region26: #{tpu_custom_call.1} parent=1 // pred_check
      _
    $region27: #{tpu_custom_call.1} parent=1 // pred_check_branch
      %29 = sbr.rel (0) target = $region29
    $region28: #{tpu_custom_call.1} parent=1 // pred_region
      _
    $region29: #{tpu_custom_call.1} parent=1 // pred_fallthru
      _
    // Predicated region
    $region30: #{tpu_custom_call.1} parent=1 // pred_check
      _
    $region31: #{tpu_custom_call.1} parent=1 // pred_check_branch
      %31 = sbr.rel (0) target = $region33
    $region32: #{tpu_custom_call.1} parent=1 // pred_region
      _
    $region33: #{tpu_custom_call.1} parent=1 // pred_fallthru
      _
    %s32 = smul.u32 0, 8
    %s33 = scalar_lea.vmem %s1, %s32
    %v34 = vld [vmem:[%s33] sm:$0xff]
    %v35 = vld [vmem:[%s3] sm:$0xff]
    %v36 = vld [vmem:[%s6] sm:$0xff]
    %p37 = scmp.eq.s32.totalorder 0, 0
    // Predicated region
    $region34: #{tpu_custom_call.1} parent=1 // pred_check
      %p38 = pneg %p37
    $region35: #{tpu_custom_call.1} parent=1 // pred_check_branch
      %40 = sbr.rel (%p38) target = $region37
    $region36: #{tpu_custom_call.1} parent=1 // pred_region
      %v41 = vld [vmem:[%s1] sm:$0xff]
      %vm42 = vcmask 261120
      %v44 = vsel %vm42, %v34, 0
      %v47 = vsel %vm42, %v41, 0
      %49 = vmatpush.xpose.msra.mxu0 0.0
      %50 = vmatpush.xpose.msra.mxu0 0.0
      %51 = vmatpush.xpose.msra.mxu0 0.0
      %52 = vmatpush.xpose.msra.mxu0 0.0
      %53 = vmatpush.xpose.msra.mxu0 0.0
      %54 = vmatpush.xpose.msra.mxu0 0.0
      %55 = vmatpush.xpose.msra.mxu0 0.0
      %56 = vmatpush.xpose.msra.mxu0 0.0
      %57 = vmatpush.xpose.msra.mxu0 0.0
      %58 = vmatpush.xpose.msra.mxu0 0.0
      %59 = vmatpush.xpose.msra.mxu0 0.0
      %60 = vmatpush.xpose.msra.mxu0 0.0
      %61 = vmatpush.xpose.msra.mxu0 0.0
      %62 = vmatpush.xpose.msra.mxu0 0.0
      %63 = vmatpush.xpose.msra.mxu0 0.0
      %64 = vmatpush.xpose.msra.mxu0 %v47
      %65 = vmatmul.f32.gmra.mxu0 %v44
      %v66 = vpop.f32.mrf.mxu0
      %v67 = vadd.f32 0.0, %v66
      %68 = vdwg.mxu0
      %v69 = vld [vmem:[%s4] sm:$0x1]
      %71 = vset.pattern.permute.xlu0 0
      %72 = vperm.xlu0 %71, %v35
      %v73 = vpop.permute.xlu0 %72
      %v76 = vperm.slane %v69, 0
      %v78 = vadd.f32 %v73, %v76
      %v79 = vmul.f32 %v67, 2.0
      %v80 = vsub.f32 %v78, %v79
      %v81 = vmax.f32 %v80, 1e-12
      %v82 = vrsqrt.pop %v81
      %v83 = vmul.f32 %v82, %v81
      %v84 = vmul.f32 %v83, %v82
      %v85 = vmul.f32 0.5, %v84
      %v86 = vsub.f32 1.5, %v85
      %v87 = vmul.f32 %v82, %v86
      %v88 = vmul.f32 %v81, %v87
      %vm89 = vcmp.eq.f32.partialorder %v81, inf
      %v90 = vsel %vm89, %v81, %v88
      %vm91 = vcmp.eq.f32.partialorder %v81, 0.0
      %v92 = vand.u32 %v81, 2147483648
      %v93 = vsel %vm91, %v92, %v90
      %v94 = vmul.f32 %v93, 4.0
      %v95 = vld [vmem:[%s7] sm:$0x1]
      %96 = vset.pattern.permute.xlu0 0
      %97 = vperm.xlu0 %96, %v36
      %v98 = vpop.permute.xlu0 %97
      %v99 = vperm.slane %v95, 0
      %vm100 = vcmp.eq.s32.totalorder %v98, %v99
      %v101 = vlaneseq
      %v102 = vshrl.u32 %v101, 7
      %v103 = vstv %s32
      %v104 = vadd.s32 %v103, %v102
      %v105 = vlaneseq
      %v106 = vand.u32 %v105, 127
      %vm107 = vcmp.ne.s32.totalorder %v104, %v106
      %vm108 = vmand %vm100, %vm107
      %vm109 = vmxor %vm100, 1
      %v110 = vsel %vm108, %v94, 0.0
      %vm111 = vcmask 64512
      %v112 = vsel %vm111, %v110, -inf
      %113 = vmax.xlane.f32.xlu0 %v112
      %v114 = vpop.xlane.xlu0 %113
      %vm115 = vcmask 7168
      %116 = vst.msk [vmem:[#allocation3] sm:$0xff] %vm115, %v114
      %v117 = vsub.f32 %v114, %v94
      %v118 = vmul.f32 %v117, 1.442695
      %v119 = vpow.pop %v118
      %v120 = vsel %vm109, %v119, 0.0
      %121 = vst.msk [vmem:[#allocation2] sm:$0xff] %vm111, %v120
      %v122 = vsel %vm111, %v110, 0.0
      %123 = vadd.xlane.f32.xlu0 %v122
      %v124 = vpop.xlane.xlu0 %123
      %125 = vst.msk [vmem:[#allocation6] sm:$0xff] %vm115, %v124
      %v126 = vsel %vm109, %v94, 0.0
      %v127 = vsel %vm111, %v126, 0.0
      %128 = vadd.xlane.f32.xlu0 %v127
      %v129 = vpop.xlane.xlu0 %128
      %130 = vst.msk [vmem:[#allocation7] sm:$0xff] %vm115, %v129
      %131 = vst.msk [vmem:[#allocation4] sm:$0xff] %vm111, 0.0
      %132 = vst.msk [vmem:[#allocation5] sm:$0xff] %vm111, 0.0
    $region37: #{tpu_custom_call.1} parent=1 // pred_fallthru
      _
    %s133 = sadd.s32 0, 0
    %s134 = smul.u32 %s133, 128
    %s135 = sadd.s32 %s134, 0
    %s136 = sld [smem:[#allocation9 + %s135]]
    %p137 = scmp.ne.s32.totalorder %s136, 0
    // Predicated region
    $region38: #{tpu_custom_call.1} parent=1 // pred_check
      %p138 = pneg %p137
    $region39: #{tpu_custom_call.1} parent=1 // pred_check_branch
      %140 = sbr.rel (%p138) target = $region41
    $region40: #{tpu_custom_call.1} parent=1 // pred_region
      %v141 = vld [vmem:[%s2] sm:$0xff]
      %vm142 = vcmask 261120
      %v144 = vsel %vm142, %v34, 0
      %v147 = vsel %vm142, %v141, 0
      %149 = vmatpush.xpose.msra.mxu0 0.0
      %150 = vmatpush.xpose.msra.mxu0 0.0
      %151 = vmatpush.xpose.msra.mxu0 0.0
      %152 = vmatpush.xpose.msra.mxu0 0.0
      %153 = vmatpush.xpose.msra.mxu0 0.0
      %154 = vmatpush.xpose.msra.mxu0 0.0
      %155 = vmatpush.xpose.msra.mxu0 0.0
      %156 = vmatpush.xpose.msra.mxu0 0.0
      %157 = vmatpush.xpose.msra.mxu0 0.0
      %158 = vmatpush.xpose.msra.mxu0 0.0
      %159 = vmatpush.xpose.msra.mxu0 0.0
      %160 = vmatpush.xpose.msra.mxu0 0.0
      %161 = vmatpush.xpose.msra.mxu0 0.0
      %162 = vmatpush.xpose.msra.mxu0 0.0
      %163 = vmatpush.xpose.msra.mxu0 0.0
      %164 = vmatpush.xpose.msra.mxu0 %v147
      %165 = vmatmul.f32.gmra.mxu0 %v144
      %v166 = vpop.f32.mrf.mxu0
      %v167 = vadd.f32 0.0, %v166
      %168 = vdwg.mxu0
      %v169 = vld [vmem:[%s5] sm:$0x1]
      %171 = vset.pattern.permute.xlu0 0
      %172 = vperm.xlu0 %171, %v35
      %v173 = vpop.permute.xlu0 %172
      %v176 = vperm.slane %v169, 0
      %v178 = vadd.f32 %v173, %v176
      %v179 = vmul.f32 %v167, 2.0
      %v180 = vsub.f32 %v178, %v179
      %v181 = vmax.f32 %v180, 1e-12
      %v182 = vrsqrt.pop %v181
      %v183 = vmul.f32 %v182, %v181
      %v184 = vmul.f32 %v183, %v182
      %v185 = vmul.f32 0.5, %v184
      %v186 = vsub.f32 1.5, %v185
      %v187 = vmul.f32 %v182, %v186
      %v188 = vmul.f32 %v181, %v187
      %vm189 = vcmp.eq.f32.partialorder %v181, inf
      %v190 = vsel %vm189, %v181, %v188
      %vm191 = vcmp.eq.f32.partialorder %v181, 0.0
      %v192 = vand.u32 %v181, 2147483648
      %v193 = vsel %vm191, %v192, %v190
      %v194 = vmul.f32 %v193, 4.0
      %v195 = vld [vmem:[%s8] sm:$0x1]
      %196 = vset.pattern.permute.xlu0 0
      %197 = vperm.xlu0 %196, %v36
      %v198 = vpop.permute.xlu0 %197
      %v199 = vperm.slane %v195, 0
      %vm200 = vcmp.eq.s32.totalorder %v198, %v199
      %v201 = vlaneseq
      %v202 = vshrl.u32 %v201, 7
      %v203 = vstv %s32
      %v204 = vadd.s32 %v203, %v202
      %s205 = smul.u32 0, 8
      %v206 = vlaneseq
      %v207 = vand.u32 %v206, 127
      %v208 = vstv %s205
      %v209 = vadd.s32 %v208, %v207
      %vm210 = vcmp.ne.s32.totalorder %v204, %v209
      %vm211 = vmand %vm200, %vm210
      %v212 = vld [vmem:[#allocation3] sm:$0xff]
      %214 = vset.pattern.permute.xlu0 0
      %215 = vperm.xlu0 %214, %v212
      %v216 = vpop.permute.xlu0 %215
      %v218 = vsub.f32 %v194, %v216
      %v219 = vmul.f32 %v218, 1.442695
      %v220 = vpow.pop %v219
      %v221 = vsel %vm211, %v220, 0.0
      %v222 = vld [vmem:[#allocation2] sm:$0xff]
      %224 = vset.pattern.permute.xlu0 0
      %225 = vperm.xlu0 %224, %v221
      %v226 = vpop.permute.xlu0 %225
      %v228 = vmul.f32 %v226, %v222
      %vm229 = vcmp.gt.f32.partialorder %v228, 1.0137527
      %v230 = vadd.f32 %v228, 1.0
      %v231 = vlog2.pop %v230
      %v232 = vmul.f32 %v231, 0.6931472
      %v233 = vsel %vm229, %v232, 0.0
      %v234 = vadd.f32 %v233, 0.0
      %v235 = vsel %vm229, 1.0, 0.0
      %v236 = vadd.f32 %v235, 0.0
      %237 = vset.pattern.permute.xlu0 1
      %238 = vperm.xlu0 %237, %v221
      %v239 = vpop.permute.xlu0 %238
      %v241 = vmul.f32 %v239, %v222
      %vm242 = vcmp.gt.f32.partialorder %v241, 1.0137527
      %v243 = vadd.f32 %v241, 1.0
      %v244 = vlog2.pop %v243
      %v245 = vmul.f32 %v244, 0.6931472
      %v246 = vsel %vm242, %v245, 0.0
      %v247 = vadd.f32 %v234, %v246
      %v248 = vsel %vm242, 1.0, 0.0
      %v249 = vadd.f32 %v236, %v248
      %250 = vset.pattern.permute.xlu0 2
      %251 = vperm.xlu0 %250, %v221
      %v252 = vpop.permute.xlu0 %251
      %v254 = vmul.f32 %v252, %v222
      %vm255 = vcmp.gt.f32.partialorder %v254, 1.0137527
      %v256 = vadd.f32 %v254, 1.0
      %v257 = vlog2.pop %v256
      %v258 = vmul.f32 %v257, 0.6931472
      %v259 = vsel %vm255, %v258, 0.0
      %v260 = vadd.f32 %v247, %v259
      %v261 = vsel %vm255, 1.0, 0.0
      %v262 = vadd.f32 %v249, %v261
      %263 = vset.pattern.permute.xlu0 3
      %264 = vperm.xlu0 %263, %v221
      %v265 = vpop.permute.xlu0 %264
      %v267 = vmul.f32 %v265, %v222
      %vm268 = vcmp.gt.f32.partialorder %v267, 1.0137527
      %v269 = vadd.f32 %v267, 1.0
      %v270 = vlog2.pop %v269
      %v271 = vmul.f32 %v270, 0.6931472
      %v272 = vsel %vm268, %v271, 0.0
      %v273 = vadd.f32 %v260, %v272
      %v274 = vsel %vm268, 1.0, 0.0
      %v275 = vadd.f32 %v262, %v274
      %276 = vset.pattern.permute.xlu0 4
      %277 = vperm.xlu0 %276, %v221
      %v278 = vpop.permute.xlu0 %277
      %v280 = vmul.f32 %v278, %v222
      %vm281 = vcmp.gt.f32.partialorder %v280, 1.0137527
      %v282 = vadd.f32 %v280, 1.0
      %v283 = vlog2.pop %v282
      %v284 = vmul.f32 %v283, 0.6931472
      %v285 = vsel %vm281, %v284, 0.0
      %v286 = vadd.f32 %v273, %v285
      %v287 = vsel %vm281, 1.0, 0.0
      %v288 = vadd.f32 %v275, %v287
      %289 = vset.pattern.permute.xlu0 5
      %290 = vperm.xlu0 %289, %v221
      %v291 = vpop.permute.xlu0 %290
      %v293 = vmul.f32 %v291, %v222
      %vm294 = vcmp.gt.f32.partialorder %v293, 1.0137527
      %v295 = vadd.f32 %v293, 1.0
      %v296 = vlog2.pop %v295
      %v297 = vmul.f32 %v296, 0.6931472
      %v298 = vsel %vm294, %v297, 0.0
      %v299 = vadd.f32 %v286, %v298
      %v300 = vsel %vm294, 1.0, 0.0
      %v301 = vadd.f32 %v288, %v300
      %302 = vset.pattern.permute.xlu0 6
      %303 = vperm.xlu0 %302, %v221
      %v304 = vpop.permute.xlu0 %303
      %v306 = vmul.f32 %v304, %v222
      %vm307 = vcmp.gt.f32.partialorder %v306, 1.0137527
      %v308 = vadd.f32 %v306, 1.0
      %v309 = vlog2.pop %v308
      %v310 = vmul.f32 %v309, 0.6931472
      %v311 = vsel %vm307, %v310, 0.0
      %v312 = vadd.f32 %v299, %v311
      %v313 = vsel %vm307, 1.0, 0.0
      %v314 = vadd.f32 %v301, %v313
      %315 = vset.pattern.permute.xlu0 7
      %316 = vperm.xlu0 %315, %v221
      %v317 = vpop.permute.xlu0 %316
      %v319 = vmul.f32 %v317, %v222
      %vm320 = vcmp.gt.f32.partialorder %v319, 1.0137527
      %v321 = vadd.f32 %v319, 1.0
      %v322 = vlog2.pop %v321
      %v323 = vmul.f32 %v322, 0.6931472
      %v324 = vsel %vm320, %v323, 0.0
      %v325 = vadd.f32 %v312, %v324
      %v326 = vsel %vm320, 1.0, 0.0
      %v327 = vadd.f32 %v314, %v326
      %v328 = vld [vmem:[#allocation4] sm:$0xff]
      %v329 = vadd.f32 %v328, %v325
      %vm330 = vcmask 64512
      %331 = vst.msk [vmem:[#allocation4] sm:$0xff] %vm330, %v329
      %v332 = vld [vmem:[#allocation5] sm:$0xff]
      %v333 = vadd.f32 %v332, %v327
      %334 = vst.msk [vmem:[#allocation5] sm:$0xff] %vm330, %v333
    $region41: #{tpu_custom_call.1} parent=1 // pred_fallthru
      _
    // Predicated region
    $region42: #{tpu_custom_call.1} parent=1 // pred_check
      %p335 = pneg %p37
    $region43: #{tpu_custom_call.1} parent=1 // pred_check_branch
      %337 = sbr.rel (%p335) target = $region45
    $region44: #{tpu_custom_call.1} parent=1 // pred_region
      %v338 = vld [vmem:[#allocation4] sm:$0xff]
      %vm339 = vcmask 64512
      %v340 = vsel %vm339, %v338, 0.0
      %341 = vadd.xlane.f32.xlu0 %v340
      %v342 = vpop.xlane.xlu0 %341
      %v343 = vld [vmem:[#allocation5] sm:$0xff]
      %v344 = vsel %vm339, %v343, 0.0
      %345 = vadd.xlane.f32.xlu0 %v344
      %v346 = vpop.xlane.xlu0 %345
      %v347 = vlaneseq
      %v348 = vand.u32 %v347, 127
      %vm349 = vcmp.eq.s32.totalorder %v348, 0
      %v350 = vsel %vm349, %v342, 0.0
      %vm351 = vcmp.eq.s32.totalorder %v348, 1
      %v352 = vsel %vm351, %v346, 0.0
      %v353 = vadd.f32 %v350, %v352
      %vm354 = vcmp.eq.s32.totalorder %v348, 2
      %v355 = vld [vmem:[#allocation6] sm:$0xff]
      %357 = vset.pattern.permute.xlu0 0
      %358 = vperm.xlu0 %357, %v355
      %v359 = vpop.permute.xlu0 %358
      %v361 = vsel %vm354, %v359, 0.0
      %v362 = vadd.f32 %v353, %v361
      %vm363 = vcmp.eq.s32.totalorder %v348, 3
      %v364 = vld [vmem:[#allocation7] sm:$0xff]
      %366 = vset.pattern.permute.xlu0 0
      %367 = vperm.xlu0 %366, %v364
      %v368 = vpop.permute.xlu0 %367
      %v370 = vsel %vm363, %v368, 0.0
      %v371 = vadd.f32 %v362, %v370
      %372 = vst [vmem:[#allocation10] sm:$0xff] %v371
    $region45: #{tpu_custom_call.1} parent=1 // pred_fallthru
      _
    // Predicated region
    $region46: #{tpu_custom_call.1} parent=1 // pred_check
      _
    $region47: #{tpu_custom_call.1} parent=1 // pred_check_branch
      %374 = sbr.rel (0) target = $region49
    $region48: #{tpu_custom_call.1} parent=1 // pred_region
      %376 = vsyncadd [#allocation11], 0
      %s378 = sshll.u32 [#allocation10], 4
      %s379 = int_to_ptr.vmem [resolvable:$true] %s378
      %s380 = sshll.u32 %s9, 4
      %s381 = int_to_ptr.hbm [resolvable:$true] %s380
      %383 = dma.vmem_to_hbm [thread:$0]  %s379, 128, %s381, [#allocation11]
    $region49: #{tpu_custom_call.1} parent=1 // pred_fallthru
      _
    // Predicated region
    $region50: #{tpu_custom_call.1} parent=1 // pred_check
      _
    $region51: #{tpu_custom_call.1} parent=1 // pred_check_branch
      %385 = sbr.rel (0) target = $region53
    $region52: #{tpu_custom_call.1} parent=1 // pred_region
      %387 = dma.done [#allocation11], 128
    $region53: #{tpu_custom_call.1} parent=1 // pred_fallthru
      _
    %388 = vsyncpa [#allocation11], 1

</llo_original>
